<compile_context>
chip_gen: v7x
topology: tpu7x:2x2x1
jax: 0.10.0
libtpu: 0.0.40
codegen_flags: <defaults>
</compile_context>

<pallas_src>
import functools

import jax
import jax.numpy as jnp
from jax.experimental import pallas as pl
from jax.experimental.pallas import tpu as pltpu

LANE = 128


# -----------------------------------------------------------------------------
# Kernel: entire forward pass (embedding MLP + PReLU + fc1 + log_softmax) fused.
# -----------------------------------------------------------------------------
def classification_kernel(
    x_ref,      # (TB, IN)   VMEM
    w1_ref,     # (IN, H)    VMEM
    b1_ref,     # (1, H)     VMEM
    w2t_ref,    # (2, H)     VMEM   embedding Linear(H, 2), pre-transposed
    wf_ref,     # (2, C)     VMEM   fc1 weight
    bf_ref,     # (1, C)     VMEM   fc1 bias
    sc_ref,     # (4,)       SMEM   [a1, a2, b2_0, b2_1]
    out_ref,    # (TB, C)    VMEM
):
    a1 = sc_ref[0]
    a2 = sc_ref[1]
    b2_0 = sc_ref[2]
    b2_1 = sc_ref[3]

    x = x_ref[...]

    # ---- embedding_net: Linear(IN, H) -> PReLU (MXU + VPU) ----
    h = jnp.dot(x, w1_ref[...], preferred_element_type=jnp.float32) + b1_ref[...]
    h = jnp.where(h >= 0.0, h, a1 * h)

    # ---- embedding_net: Linear(H, 2) as two lane reductions (N=2 would waste MXU) ----
    e0 = jnp.sum(h * w2t_ref[0:1, :], axis=-1, keepdims=True) + b2_0   # (TB, 1)
    e1 = jnp.sum(h * w2t_ref[1:2, :], axis=-1, keepdims=True) + b2_1   # (TB, 1)

    # ---- ClassificationNet.nonlinear: shared-weight PReLU ----
    e0 = jnp.where(e0 >= 0.0, e0, a2 * e0)
    e1 = jnp.where(e1 >= 0.0, e1, a2 * e1)

    # ---- fc1: Linear(2, C) as VPU broadcast-FMA (K=2 would waste MXU) ----
    logits = e0 * wf_ref[0:1, :] + e1 * wf_ref[1:2, :] + bf_ref[...]   # (TB, C)

    # ---- log_softmax over the class axis (narrow, no padding columns) ----
    m = jnp.max(logits, axis=-1, keepdims=True)
    z = logits - m
    lse = jnp.log(jnp.sum(jnp.exp(z), axis=-1, keepdims=True))
    out_ref[...] = (z - lse).astype(out_ref.dtype)


# -----------------------------------------------------------------------------
# Hardware / tiling heuristics
# -----------------------------------------------------------------------------
def _num_tensorcores():
    """TensorCores per chip that a 'parallel' grid axis can be sharded over."""
    try:
        kind = (jax.devices()[0].device_kind or "").lower()
    except Exception:
        return 1
    # v7x has 2 TCs per chip; v4 / v5p are megacore (2 TCs); v5e / v6e have 1.
    return 2 if ("v7" in kind or "v4" in kind or "v5p" in kind) else 1


def _pad_lane(n):
    return pl.cdiv(n, LANE) * LANE


def _pick_batch_tile(B, IN, H, C, n_cores):
    """Largest safe batch tile; on multi-TC chips prefer a grid length that is a
    multiple of the core count (ideally exactly n_cores steps)."""
    # Honest VMEM residency per row at f32 VMEM layout widths:
    #   x + out tiles are double-buffered; h, logits/z/exp are materialized f32.
    bytes_per_row = 4 * (2 * _pad_lane(IN) + 2 * _pad_lane(C)
                         + _pad_lane(H) + 3 * _pad_lane(C))
    budget = 24 * 1024 * 1024                    # headroom under the 32 MiB scoped limit
    cap = max(8, min(8192, (budget // bytes_per_row) // 8 * 8))

    if B % 8 != 0 or B <= 8:
        return B                                 # tiny / ragged batch: one full block

    if n_cores > 1:
        # Ideal: exactly n_cores grid steps.
        tb = B // n_cores
        if B % n_cores == 0 and tb % 8 == 0 and tb <= cap:
            return tb

    limit = min(cap, B)
    fallback = None
    for cand in range(limit - limit % 8, 7, -8):
        if B % cand != 0:
            continue
        if n_cores > 1 and (B // cand) % n_cores != 0:
            if fallback is None:
                fallback = cand                  # largest divisor, uneven core split
            continue
        return cand
    return fallback if fallback is not None else B


# -----------------------------------------------------------------------------
# One-time parameter preparation (hoisted out of the jitted forward)
# -----------------------------------------------------------------------------
def prepare_params(params):
    """Pack raw parameters into the layout the kernel consumes. Call once."""
    w1, b1, a1, w2, b2, a2, wf, bf = params
    w1 = jnp.asarray(w1, jnp.float32)                       # (IN, H)
    b1 = jnp.asarray(b1, jnp.float32).reshape(1, -1)        # (1, H)
    w2t = jnp.asarray(w2, jnp.float32).T                    # (2, H)
    wf = jnp.asarray(wf, jnp.float32)                       # (2, C)
    bf = jnp.asarray(bf, jnp.float32).reshape(1, -1)        # (1, C)
    scalars = jnp.concatenate(
        [jnp.asarray(a1, jnp.float32).reshape(-1),
         jnp.asarray(a2, jnp.float32).reshape(-1),
         jnp.asarray(b2, jnp.float32).reshape(-1)])          # (4,) = [a1, a2, b2_0, b2_1]
    return (w1, b1, w2t, wf, bf, scalars)


# -----------------------------------------------------------------------------
# Wrapper
# -----------------------------------------------------------------------------
@functools.partial(jax.jit, static_argnames=("batch_tile",))
def classification_net_forward(x, prepared, *, batch_tile=None):
    """Fused ClassificationNet forward.  x: (B, IN) f32 -> (B, C) log-probs."""
    w1, b1, w2t, wf, bf, scalars = prepared
    B, IN = x.shape
    H = w1.shape[1]
    C = wf.shape[1]

    n_cores = _num_tensorcores()
    tb = _pick_batch_tile(B, IN, H, C, n_cores) if batch_tile is None else batch_tile
    assert B % tb == 0 and (tb % 8 == 0 or tb == B)
    grid = (B // tb,)

    rep = lambda i: (0, 0)  # weights are grid-invariant

    cost = pl.CostEstimate(
        flops=2 * B * (IN * H + H * 2 + 2 * C),
        transcendentals=B * (C + 1),
        bytes_accessed=4 * (B * IN + B * C + IN * H + 3 * H + 3 * C + 2 + 4),
    )

    out = pl.pallas_call(
        classification_kernel,
        out_shape=jax.ShapeDtypeStruct((B, C), jnp.float32),
        grid_spec=pl.GridSpec(
            grid=grid,
            in_specs=[
                pl.BlockSpec((tb, IN), lambda i: (i, 0)),              # x
                pl.BlockSpec((IN, H), rep),                            # w1
                pl.BlockSpec((1, H), rep),                             # b1
                pl.BlockSpec((2, H), rep),                             # w2^T
                pl.BlockSpec((2, C), rep),                             # fc1 weight
                pl.BlockSpec((1, C), rep),                             # fc1 bias
                pl.BlockSpec(memory_space=pltpu.MemorySpace.SMEM),     # [a1, a2, b2_0, b2_1]
            ],
            out_specs=pl.BlockSpec((tb, C), lambda i: (i, 0)),
        ),
        compiler_params=pltpu.CompilerParams(
            dimension_semantics=("parallel",),
            vmem_limit_bytes=32 * 1024 * 1024,
        ),
        cost_estimate=cost,
    )(x, w1, b1, w2t, wf, bf, scalars)

    return out


# -----------------------------------------------------------------------------
# Deterministic parameter init (synthetic; shapes from the module definitions)
# -----------------------------------------------------------------------------
def init_params(key, in_features, hidden, n_classes):
    k1, k2, k3, k4, k5, k6 = jax.random.split(key, 6)
    w1 = jax.random.normal(k1, (in_features, hidden), jnp.float32) / jnp.sqrt(in_features)
    b1 = 0.1 * jax.random.normal(k4, (1, hidden), jnp.float32)
    a1 = jnp.full((1,), 0.25, jnp.float32)        # embedding-net PReLU default
    w2 = jax.random.normal(k2, (hidden, 2), jnp.float32) / jnp.sqrt(hidden)
    b2 = 0.1 * jax.random.normal(k5, (2,), jnp.float32)
    a2 = jnp.full((1,), 0.25, jnp.float32)        # ClassificationNet.nonlinear
    wf = jax.random.normal(k3, (2, n_classes), jnp.float32) / jnp.sqrt(2.0)
    bf = 0.1 * jax.random.normal(k6, (1, n_classes), jnp.float32)
    return (w1, b1, a1, w2, b2, a2, wf, bf)


def ref_forward(x, params):
    """Pure-JAX reference mirroring the PyTorch forward."""
    w1, b1, a1, w2, b2, a2, wf, bf = params
    h = x @ w1 + b1
    h = jnp.where(h >= 0, h, a1[0] * h)
    e = h @ w2 + b2
    e = jnp.where(e >= 0, e, a2[0] * e)            # self.nonlinear
    logits = e @ wf + bf                           # self.fc1
    return jax.nn.log_softmax(logits, axis=-1)     # F.log_softmax(..., dim=-1)


if __name__ == "__main__":
    # Small shapes: embedding dim is 2 by construction (fc1 = Linear(2, n_classes)).
    B, IN, H, C = 128, 32, 32, 10

    key = jax.random.PRNGKey(0)
    kx, kp = jax.random.split(key)
    x = jax.random.normal(kx, (B, IN), jnp.float32)
    params = init_params(kp, IN, H, C)
    prepared = prepare_params(params)              # one-time weight plumbing, outside jit

    scores = classification_net_forward(x, prepared)
    scores = jax.block_until_ready(scores)

    ref = ref_forward(x, params)
    assert scores.shape == (B, C)
    assert jnp.allclose(scores, ref, atol=1e-4, rtol=1e-4), (
        f"mismatch vs JAX reference, max |diff| = {jnp.max(jnp.abs(scores - ref))}")
    # log_softmax rows must sum to 1 in probability space
    assert jnp.allclose(jnp.sum(jnp.exp(scores), axis=-1), 1.0, atol=1e-5)

    print("KERNEL_OK")
</pallas_src>

<mosaic_0001>
module attributes {stable_mosaic.version = 11 : i64} {
  func.func @classification_kernel(%arg0: i32, %arg1: memref<128x32xf32, #tpu.memory_space<vmem>>, %arg2: memref<32x32xf32, #tpu.memory_space<vmem>>, %arg3: memref<1x32xf32, #tpu.memory_space<vmem>>, %arg4: memref<2x32xf32, #tpu.memory_space<vmem>>, %arg5: memref<2x10xf32, #tpu.memory_space<vmem>>, %arg6: memref<1x10xf32, #tpu.memory_space<vmem>>, %arg7: memref<4xf32, #tpu.memory_space<smem>>, %arg8: memref<128x10xf32, #tpu.memory_space<vmem>>) attributes {dimension_semantics = [#tpu.dimension_semantics<parallel>], iteration_bounds = array<i64: 1>, scalar_prefetch = 0 : i64, scratch_operands = 0 : i64, tpu.core_type = #tpu.core_type<tc>, window_params = [{transform_indices = @transform_0, window_bounds = array<i64: 128, 32>}, {pipeline_mode = #tpu.pipeline_mode<synchronous>, transform_indices = @transform_1, window_bounds = array<i64: 32, 32>}, {pipeline_mode = #tpu.pipeline_mode<synchronous>, transform_indices = @transform_2, window_bounds = array<i64: 1, 32>}, {pipeline_mode = #tpu.pipeline_mode<synchronous>, transform_indices = @transform_3, window_bounds = array<i64: 2, 32>}, {pipeline_mode = #tpu.pipeline_mode<synchronous>, transform_indices = @transform_4, window_bounds = array<i64: 2, 10>}, {pipeline_mode = #tpu.pipeline_mode<synchronous>, transform_indices = @transform_5, window_bounds = array<i64: 1, 10>}, {transform_indices = @transform_6, window_bounds = array<i64: 4>}, {transform_indices = @transform_7, window_bounds = array<i64: 128, 10>}]} {
    %c0 = arith.constant 0 : index
    %0 = memref.load %arg7[%c0] : memref<4xf32, #tpu.memory_space<smem>>
    %c1 = arith.constant 1 : index
    %1 = memref.load %arg7[%c1] : memref<4xf32, #tpu.memory_space<smem>>
    %c2 = arith.constant 2 : index
    %2 = memref.load %arg7[%c2] : memref<4xf32, #tpu.memory_space<smem>>
    %c3 = arith.constant 3 : index
    %3 = memref.load %arg7[%c3] : memref<4xf32, #tpu.memory_space<smem>>
    %c0_0 = arith.constant 0 : index
    %c0_1 = arith.constant 0 : index
    %4 = vector.load %arg1[%c0_0, %c0_1] : memref<128x32xf32, #tpu.memory_space<vmem>>, vector<128x32xf32>
    %c0_2 = arith.constant 0 : index
    %c0_3 = arith.constant 0 : index
    %5 = vector.load %arg2[%c0_2, %c0_3] : memref<32x32xf32, #tpu.memory_space<vmem>>, vector<32x32xf32>
    %cst = arith.constant dense<0.000000e+00> : vector<128x32xf32>
    %6 = tpu.matmul %4, %5, %cst {dimension_numbers = #tpu.dot_dimension_numbers<[1], [0], [0], [1], [0, 0, 1, 1], [], []>} : vector<128x32xf32>, vector<32x32xf32>, vector<128x32xf32> -> vector<128x32xf32>
    %c0_4 = arith.constant 0 : index
    %c0_5 = arith.constant 0 : index
    %7 = vector.load %arg3[%c0_4, %c0_5] : memref<1x32xf32, #tpu.memory_space<vmem>>, vector<1x32xf32>
    %8 = vector.broadcast %7 : vector<1x32xf32> to vector<128x32xf32>
    %9 = arith.addf %6, %8 : vector<128x32xf32>
    %cst_6 = arith.constant 0.000000e+00 : f32
    %10 = vector.broadcast %cst_6 : f32 to vector<128x32xf32>
    %11 = arith.cmpf oge, %9, %10 : vector<128x32xf32>
    %12 = vector.broadcast %0 : f32 to vector<128x32xf32>
    %13 = arith.mulf %12, %9 : vector<128x32xf32>
    %14 = arith.select %11, %9, %13 : vector<128x32xi1>, vector<128x32xf32>
    %c0_7 = arith.constant 0 : index
    %c0_8 = arith.constant 0 : index
    %15 = vector.load %arg4[%c0_7, %c0_8] : memref<2x32xf32, #tpu.memory_space<vmem>>, vector<1x32xf32>
    %16 = vector.broadcast %15 : vector<1x32xf32> to vector<128x32xf32>
    %17 = arith.mulf %14, %16 : vector<128x32xf32>
    %cst_9 = arith.constant dense<0.000000e+00> : vector<128xf32>
    %18 = vector.multi_reduction <add>, %17, %cst_9 [1] : vector<128x32xf32> to vector<128xf32>
    %19 = vector.shape_cast %18 : vector<128xf32> to vector<128x1xf32>
    %20 = vector.broadcast %2 : f32 to vector<128x1xf32>
    %21 = arith.addf %19, %20 : vector<128x1xf32>
    %c1_10 = arith.constant 1 : index
    %c0_11 = arith.constant 0 : index
    %22 = vector.load %arg4[%c1_10, %c0_11] : memref<2x32xf32, #tpu.memory_space<vmem>>, vector<1x32xf32>
    %23 = vector.broadcast %22 : vector<1x32xf32> to vector<128x32xf32>
    %24 = arith.mulf %14, %23 : vector<128x32xf32>
    %cst_12 = arith.constant dense<0.000000e+00> : vector<128xf32>
    %25 = vector.multi_reduction <add>, %24, %cst_12 [1] : vector<128x32xf32> to vector<128xf32>
    %26 = vector.shape_cast %25 : vector<128xf32> to vector<128x1xf32>
    %27 = vector.broadcast %3 : f32 to vector<128x1xf32>
    %28 = arith.addf %26, %27 : vector<128x1xf32>
    %cst_13 = arith.constant 0.000000e+00 : f32
    %29 = vector.broadcast %cst_13 : f32 to vector<128x1xf32>
    %30 = arith.cmpf oge, %21, %29 : vector<128x1xf32>
    %31 = vector.broadcast %1 : f32 to vector<128x1xf32>
    %32 = arith.mulf %31, %21 : vector<128x1xf32>
    %33 = arith.select %30, %21, %32 : vector<128x1xi1>, vector<128x1xf32>
    %cst_14 = arith.constant 0.000000e+00 : f32
    %34 = vector.broadcast %cst_14 : f32 to vector<128x1xf32>
    %35 = arith.cmpf oge, %28, %34 : vector<128x1xf32>
    %36 = vector.broadcast %1 : f32 to vector<128x1xf32>
    %37 = arith.mulf %36, %28 : vector<128x1xf32>
    %38 = arith.select %35, %28, %37 : vector<128x1xi1>, vector<128x1xf32>
    %c0_15 = arith.constant 0 : index
    %c0_16 = arith.constant 0 : index
    %39 = vector.load %arg5[%c0_15, %c0_16] : memref<2x10xf32, #tpu.memory_space<vmem>>, vector<1x10xf32>
    %40 = vector.broadcast %33 : vector<128x1xf32> to vector<128x10xf32>
    %41 = vector.broadcast %39 : vector<1x10xf32> to vector<128x10xf32>
    %42 = arith.mulf %40, %41 : vector<128x10xf32>
    %c1_17 = arith.constant 1 : index
    %c0_18 = arith.constant 0 : index
    %43 = vector.load %arg5[%c1_17, %c0_18] : memref<2x10xf32, #tpu.memory_space<vmem>>, vector<1x10xf32>
    %44 = vector.broadcast %38 : vector<128x1xf32> to vector<128x10xf32>
    %45 = vector.broadcast %43 : vector<1x10xf32> to vector<128x10xf32>
    %46 = arith.mulf %44, %45 : vector<128x10xf32>
    %47 = arith.addf %42, %46 : vector<128x10xf32>
    %c0_19 = arith.constant 0 : index
    %c0_20 = arith.constant 0 : index
    %48 = vector.load %arg6[%c0_19, %c0_20] : memref<1x10xf32, #tpu.memory_space<vmem>>, vector<1x10xf32>
    %49 = vector.broadcast %48 : vector<1x10xf32> to vector<128x10xf32>
    %50 = arith.addf %47, %49 : vector<128x10xf32>
    %cst_21 = arith.constant dense<0xFF800000> : vector<128xf32>
    %51 = vector.multi_reduction <maximumf>, %50, %cst_21 [1] : vector<128x10xf32> to vector<128xf32>
    %52 = vector.shape_cast %51 : vector<128xf32> to vector<128x1xf32>
    %53 = vector.broadcast %52 : vector<128x1xf32> to vector<128x10xf32>
    %54 = arith.subf %50, %53 : vector<128x10xf32>
    %55 = math.exp %54 : vector<128x10xf32>
    %cst_22 = arith.constant dense<0.000000e+00> : vector<128xf32>
    %56 = vector.multi_reduction <add>, %55, %cst_22 [1] : vector<128x10xf32> to vector<128xf32>
    %57 = vector.shape_cast %56 : vector<128xf32> to vector<128x1xf32>
    %58 = math.log %57 : vector<128x1xf32>
    %59 = vector.broadcast %58 : vector<128x1xf32> to vector<128x10xf32>
    %60 = arith.subf %54, %59 : vector<128x10xf32>
    %c0_23 = arith.constant 0 : index
    %c0_24 = arith.constant 0 : index
    %61 = vector.load %arg8[%c0_23, %c0_24] : memref<128x10xf32, #tpu.memory_space<vmem>>, vector<128x10xf32>
    tpu.vector_store %arg8[%c0_23, %c0_24], %60 {strides = array<i32>} : memref<128x10xf32, #tpu.memory_space<vmem>>, vector<128x10xf32>,
    return
  }
  func.func @transform_0(%arg0: i32) -> (i32, i32) {
    %c0_i32 = arith.constant 0 : i32
    %c0_i32_0 = arith.constant 0 : i32
    return %arg0, %c0_i32 : i32, i32
  }
  func.func @transform_1(%arg0: i32) -> (i32, i32) {
    %c0_i32 = arith.constant 0 : i32
    %c0_i32_0 = arith.constant 0 : i32
    %c0_i32_1 = arith.constant 0 : i32
    return %c0_i32, %c0_i32_0 : i32, i32
  }
  func.func @transform_2(%arg0: i32) -> (i32, i32) {
    %c0_i32 = arith.constant 0 : i32
    %c0_i32_0 = arith.constant 0 : i32
    %c0_i32_1 = arith.constant 0 : i32
    return %c0_i32, %c0_i32_0 : i32, i32
  }
  func.func @transform_3(%arg0: i32) -> (i32, i32) {
    %c0_i32 = arith.constant 0 : i32
    %c0_i32_0 = arith.constant 0 : i32
    %c0_i32_1 = arith.constant 0 : i32
    return %c0_i32, %c0_i32_0 : i32, i32
  }
  func.func @transform_4(%arg0: i32) -> (i32, i32) {
    %c0_i32 = arith.constant 0 : i32
    %c0_i32_0 = arith.constant 0 : i32
    %c0_i32_1 = arith.constant 0 : i32
    return %c0_i32, %c0_i32_0 : i32, i32
  }
  func.func @transform_5(%arg0: i32) -> (i32, i32) {
    %c0_i32 = arith.constant 0 : i32
    %c0_i32_0 = arith.constant 0 : i32
    %c0_i32_1 = arith.constant 0 : i32
    return %c0_i32, %c0_i32_0 : i32, i32
  }
  func.func @transform_6(%arg0: i32) -> i32 {
    %c0_i32 = arith.constant 0 : i32
    %c0_i32_0 = arith.constant 0 : i32
    return %c0_i32 : i32
  }
  func.func @transform_7(%arg0: i32) -> (i32, i32) {
    %c0_i32 = arith.constant 0 : i32
    %c0_i32_0 = arith.constant 0 : i32
    return %arg0, %c0_i32 : i32, i32
  }
}

</mosaic_0001>

<llo_original>
// kernel: classification_net_forward.1
$region0: #{classification_net_forward.1}
  #allocation0 [shape = 'u32[]', space=smem, size = 0x4, offset = 0x4, fixed_abs, tag = 'smem constant byte address 0x4 - core index']
  #allocation1 [shape = 'u32[144,128]{1,0:T(1,128)}', space=vmem, size = 0x12000, scoped, tag = 'internal scratch']
  %s0 = inlined_call_operand.vmem [shape: f32[128,32], index: 0, kind: input, shape index: {}]
  %s1 = inlined_call_operand.vmem [shape: f32[32,32], index: 1, kind: input, shape index: {}]
  %s2 = inlined_call_operand.vmem [shape: f32[1,32], index: 2, kind: input, shape index: {}]
  %s3 = inlined_call_operand.vmem [shape: f32[2,32], index: 3, kind: input, shape index: {}]
  %s4 = inlined_call_operand.vmem [shape: f32[2,10], index: 4, kind: input, shape index: {}]
  %s5 = inlined_call_operand.vmem [shape: f32[1,10], index: 5, kind: input, shape index: {}]
  %s6 = inlined_call_operand.vmem [shape: f32[4], index: 6, kind: input, shape index: {}]
  %s7 = inlined_call_operand.vmem [shape: f32[128,10], index: 7, kind: output, shape index: {}]
  %s8 = sld [smem:[#allocation0]]
  $region42: #{classification_net_forward.1} parent=0
    _
  %s10 = ssub.s32 1, %s8
  %s11 = scalar_select 0, %s10, %s8
  $region1: #{classification_net_forward.1} parent=0
    #allocation2 [shape = 'u8[512]{0}', space=smem, size = 0x200, scoped, tag = 'input window, operand 6, single buffered']
    #allocation3 [shape = 's32[1]{0}', space=sflag, size = 0x4, scoped, tag = 'scoped memory for classification_net_forward.1']
    %12 = vsyncpa [#allocation3], 0
    // Predicated region
    $region2: #{classification_net_forward.1} parent=1 // pred_check
      _
    $region3: #{classification_net_forward.1} parent=1 // pred_check_branch
      %14 = sbr.rel (0) target = $region5
    $region4: #{classification_net_forward.1} parent=1 // pred_region
      _
    $region5: #{classification_net_forward.1} parent=1 // pred_fallthru
      _
    // Predicated region
    $region6: #{classification_net_forward.1} parent=1 // pred_check
      _
    $region7: #{classification_net_forward.1} parent=1 // pred_check_branch
      %16 = sbr.rel (0) target = $region9
    $region8: #{classification_net_forward.1} parent=1 // pred_region
      _
    $region9: #{classification_net_forward.1} parent=1 // pred_fallthru
      _
    // Predicated region
    $region10: #{classification_net_forward.1} parent=1 // pred_check
      _
    $region11: #{classification_net_forward.1} parent=1 // pred_check_branch
      %18 = sbr.rel (0) target = $region13
    $region12: #{classification_net_forward.1} parent=1 // pred_region
      _
    $region13: #{classification_net_forward.1} parent=1 // pred_fallthru
      _
    // Predicated region
    $region14: #{classification_net_forward.1} parent=1 // pred_check
      _
    $region15: #{classification_net_forward.1} parent=1 // pred_check_branch
      %20 = sbr.rel (0) target = $region17
    $region16: #{classification_net_forward.1} parent=1 // pred_region
      _
    $region17: #{classification_net_forward.1} parent=1 // pred_fallthru
      _
    // Predicated region
    $region18: #{classification_net_forward.1} parent=1 // pred_check
      _
    $region19: #{classification_net_forward.1} parent=1 // pred_check_branch
      %22 = sbr.rel (0) target = $region21
    $region20: #{classification_net_forward.1} parent=1 // pred_region
      _
    $region21: #{classification_net_forward.1} parent=1 // pred_fallthru
      _
    // Predicated region
    $region22: #{classification_net_forward.1} parent=1 // pred_check
      _
    $region23: #{classification_net_forward.1} parent=1 // pred_check_branch
      %24 = sbr.rel (0) target = $region25
    $region24: #{classification_net_forward.1} parent=1 // pred_region
      _
    $region25: #{classification_net_forward.1} parent=1 // pred_fallthru
      _
    // Predicated region
    $region26: #{classification_net_forward.1} parent=1 // pred_check
      _
    $region27: #{classification_net_forward.1} parent=1 // pred_check_branch
      %26 = sbr.rel (0) target = $region29
    $region28: #{classification_net_forward.1} parent=1 // pred_region
      %s28 = ssub.s32 16, 16
      %29 = vsyncadd [#allocation3], %s28
      %s31 = sshll.u32 %s6, 4
      %s32 = int_to_ptr.vmem [resolvable:$true] %s31
      %34 = dma.vmem_to_smem %s32, 16, [#allocation2], [#allocation3]
    $region29: #{classification_net_forward.1} parent=1 // pred_fallthru
      _
    // Predicated region
    $region30: #{classification_net_forward.1} parent=1 // pred_check
      _
    $region31: #{classification_net_forward.1} parent=1 // pred_check_branch
      %36 = sbr.rel (0) target = $region33
    $region32: #{classification_net_forward.1} parent=1 // pred_region
      %37 = dma.done [#allocation3], 16
    $region33: #{classification_net_forward.1} parent=1 // pred_fallthru
      _
    %38 = sfence
    %s39 = sld [smem:[#allocation2]]
    %s40 = sld [smem:[#allocation2 + $0x1]]
    %s41 = sld [smem:[#allocation2 + $0x2]]
    %s42 = sld [smem:[#allocation2 + $0x3]]
    %v43 = vld [vmem:[%s0] sm:$0xff]
    %v44 = vld [vmem:[%s0 + $0x8] sm:$0xff]
    %v45 = vld [vmem:[%s0 + $0x10] sm:$0xff]
    %v46 = vld [vmem:[%s0 + $0x18] sm:$0xff]
    %v47 = vld [vmem:[%s0 + $0x20] sm:$0xff]
    %v48 = vld [vmem:[%s0 + $0x28] sm:$0xff]
    %v49 = vld [vmem:[%s0 + $0x30] sm:$0xff]
    %v50 = vld [vmem:[%s0 + $0x38] sm:$0xff]
    %v51 = vld [vmem:[%s0 + $0x40] sm:$0xff]
    %v52 = vld [vmem:[%s0 + $0x48] sm:$0xff]
    %v53 = vld [vmem:[%s0 + $0x50] sm:$0xff]
    %v54 = vld [vmem:[%s0 + $0x58] sm:$0xff]
    %v55 = vld [vmem:[%s0 + $0x60] sm:$0xff]
    %v56 = vld [vmem:[%s0 + $0x68] sm:$0xff]
    %v57 = vld [vmem:[%s0 + $0x70] sm:$0xff]
    %v58 = vld [vmem:[%s0 + $0x78] sm:$0xff]
    %v59 = vld [vmem:[%s1] sm:$0xff]
    %v60 = vld [vmem:[%s1 + $0x8] sm:$0xff]
    %v61 = vld [vmem:[%s1 + $0x10] sm:$0xff]
    %v62 = vld [vmem:[%s1 + $0x18] sm:$0xff]
    %v63 = vld [vmem:[%s2] sm:$0x1]
    %v65 = vlaneseq
    %v66 = vshrl.u32 %v65, 7
    %v67 = vsub.s32 0, %v66
    %v68 = vrot.slane %v63, %v67
    %vm70 = vcmask 261120
    %v72 = vsel %vm70, %v43, 0
    %v75 = vsel %vm70, %v44, 0
    %v78 = vsel %vm70, %v45, 0
    %v81 = vsel %vm70, %v46, 0
    %v84 = vsel %vm70, %v47, 0
    %v87 = vsel %vm70, %v48, 0
    %v90 = vsel %vm70, %v49, 0
    %v93 = vsel %vm70, %v50, 0
    %v96 = vsel %vm70, %v51, 0
    %v99 = vsel %vm70, %v52, 0
    %v102 = vsel %vm70, %v53, 0
    %v105 = vsel %vm70, %v54, 0
    %v108 = vsel %vm70, %v55, 0
    %v111 = vsel %vm70, %v56, 0
    %v114 = vsel %vm70, %v57, 0
    %v117 = vsel %vm70, %v58, 0
    %119 = vmatprep.subr.mxu0 0.0
    %120 = vmatpush1.msra.mxu0 %v59
    %121 = vmatprep.subr.mxu0 0.0
    %122 = vmatpush1.msra.mxu0 %v60
    %123 = vmatprep.subr.mxu0 0.0
    %124 = vmatpush1.msra.mxu0 %v61
    %125 = vmatprep.subr.mxu0 0.0
    %126 = vmatpush1.msra.mxu0 %v62
    %127 = vmatprep.subr.mxu0 0.0
    %128 = vmatpush1.msra.mxu0 0.0
    %129 = vmatprep.subr.mxu0 0.0
    %130 = vmatpush1.msra.mxu0 0.0
    %131 = vmatprep.subr.mxu0 0.0
    %132 = vmatpush1.msra.mxu0 0.0
    %133 = vmatprep.subr.mxu0 0.0
    %134 = vmatpush1.msra.mxu0 0.0
    %135 = vmatprep.subr.mxu0 0.0
    %136 = vmatpush1.msra.mxu0 0.0
    %137 = vmatprep.subr.mxu0 0.0
    %138 = vmatpush1.msra.mxu0 0.0
    %139 = vmatprep.subr.mxu0 0.0
    %140 = vmatpush1.msra.mxu0 0.0
    %141 = vmatprep.subr.mxu0 0.0
    %142 = vmatpush1.msra.mxu0 0.0
    %143 = vmatprep.subr.mxu0 0.0
    %144 = vmatpush1.msra.mxu0 0.0
    %145 = vmatprep.subr.mxu0 0.0
    %146 = vmatpush1.msra.mxu0 0.0
    %147 = vmatprep.subr.mxu0 0.0
    %148 = vmatpush1.msra.mxu0 0.0
    %149 = vmatprep.subr.mxu0 0.0
    %150 = vmatpush1.msra.mxu0 0.0
    %151 = vmatprep.subr.mxu0 0.0
    %152 = vmatpush1.msra.mxu0 0.0
    %153 = vmatprep.subr.mxu0 0.0
    %154 = vmatpush1.msra.mxu0 0.0
    %155 = vmatprep.subr.mxu0 0.0
    %156 = vmatpush1.msra.mxu0 0.0
    %157 = vmatprep.subr.mxu0 0.0
    %158 = vmatpush1.msra.mxu0 0.0
    %159 = vmatprep.subr.mxu0 0.0
    %160 = vmatpush1.msra.mxu0 0.0
    %161 = vmatprep.subr.mxu0 0.0
    %162 = vmatpush1.msra.mxu0 0.0
    %163 = vmatprep.subr.mxu0 0.0
    %164 = vmatpush1.msra.mxu0 0.0
    %165 = vmatprep.subr.mxu0 0.0
    %166 = vmatpush1.msra.mxu0 0.0
    %167 = vmatprep.subr.mxu0 0.0
    %168 = vmatpush1.msra.mxu0 0.0
    %169 = vmatprep.subr.mxu0 0.0
    %170 = vmatpush1.msra.mxu0 0.0
    %171 = vmatprep.subr.mxu0 0.0
    %172 = vmatpush1.msra.mxu0 0.0
    %173 = vmatprep.subr.mxu0 0.0
    %174 = vmatpush1.msra.mxu0 0.0
    %175 = vmatprep.subr.mxu0 0.0
    %176 = vmatpush1.msra.mxu0 0.0
    %177 = vmatprep.subr.mxu0 0.0
    %178 = vmatpush1.msra.mxu0 0.0
    %179 = vmatprep.subr.mxu0 0.0
    %180 = vmatpush1.msra.mxu0 0.0
    %181 = vmatprep.subr.mxu0 0.0
    %182 = vmatpush1.msra.mxu0 0.0
    %183 = vmatprep.mubr.f32.mxu0 0.0
    %184 = vmatmul.mubr.f32.gmra.mrb[0].mxu0 %v72
    %v185 = vpop.f32.mrb[0].mxu0
    %v186 = vadd.f32 %v68, %v185
    %v187 = vpop.f32.mrb[0].mxu0
    %188 = vmatprep.mubr.f32.mxu0 0.0
    %189 = vmatmul.mubr.f32.gmra.mrb[0].mxu0 %v75
    %v190 = vpop.f32.mrb[0].mxu0
    %v191 = vadd.f32 %v68, %v190
    %v192 = vpop.f32.mrb[0].mxu0
    %193 = vmatprep.mubr.f32.mxu0 0.0
    %194 = vmatmul.mubr.f32.gmra.mrb[0].mxu0 %v78
    %v195 = vpop.f32.mrb[0].mxu0
    %v196 = vadd.f32 %v68, %v195
    %v197 = vpop.f32.mrb[0].mxu0
    %198 = vmatprep.mubr.f32.mxu0 0.0
    %199 = vmatmul.mubr.f32.gmra.mrb[0].mxu0 %v81
    %v200 = vpop.f32.mrb[0].mxu0
    %v201 = vadd.f32 %v68, %v200
    %v202 = vpop.f32.mrb[0].mxu0
    %203 = vmatprep.mubr.f32.mxu0 0.0
    %204 = vmatmul.mubr.f32.gmra.mrb[0].mxu0 %v84
    %v205 = vpop.f32.mrb[0].mxu0
    %v206 = vadd.f32 %v68, %v205
    %v207 = vpop.f32.mrb[0].mxu0
    %208 = vmatprep.mubr.f32.mxu0 0.0
    %209 = vmatmul.mubr.f32.gmra.mrb[0].mxu0 %v87
    %v210 = vpop.f32.mrb[0].mxu0
    %v211 = vadd.f32 %v68, %v210
    %v212 = vpop.f32.mrb[0].mxu0
    %213 = vmatprep.mubr.f32.mxu0 0.0
    %214 = vmatmul.mubr.f32.gmra.mrb[0].mxu0 %v90
    %v215 = vpop.f32.mrb[0].mxu0
    %v216 = vadd.f32 %v68, %v215
    %v217 = vpop.f32.mrb[0].mxu0
    %218 = vmatprep.mubr.f32.mxu0 0.0
    %219 = vmatmul.mubr.f32.gmra.mrb[0].mxu0 %v93
    %v220 = vpop.f32.mrb[0].mxu0
    %v221 = vadd.f32 %v68, %v220
    %v222 = vpop.f32.mrb[0].mxu0
    %223 = vmatprep.mubr.f32.mxu0 0.0
    %224 = vmatmul.mubr.f32.gmra.mrb[0].mxu0 %v96
    %v225 = vpop.f32.mrb[0].mxu0
    %v226 = vadd.f32 %v68, %v225
    %v227 = vpop.f32.mrb[0].mxu0
    %228 = vmatprep.mubr.f32.mxu0 0.0
    %229 = vmatmul.mubr.f32.gmra.mrb[0].mxu0 %v99
    %v230 = vpop.f32.mrb[0].mxu0
    %v231 = vadd.f32 %v68, %v230
    %v232 = vpop.f32.mrb[0].mxu0
    %233 = vmatprep.mubr.f32.mxu0 0.0
    %234 = vmatmul.mubr.f32.gmra.mrb[0].mxu0 %v102
    %v235 = vpop.f32.mrb[0].mxu0
    %v236 = vadd.f32 %v68, %v235
    %v237 = vpop.f32.mrb[0].mxu0
    %238 = vmatprep.mubr.f32.mxu0 0.0
    %239 = vmatmul.mubr.f32.gmra.mrb[0].mxu0 %v105
    %v240 = vpop.f32.mrb[0].mxu0
    %v241 = vadd.f32 %v68, %v240
    %v242 = vpop.f32.mrb[0].mxu0
    %243 = vmatprep.mubr.f32.mxu0 0.0
    %244 = vmatmul.mubr.f32.gmra.mrb[0].mxu0 %v108
    %v245 = vpop.f32.mrb[0].mxu0
    %v246 = vadd.f32 %v68, %v245
    %v247 = vpop.f32.mrb[0].mxu0
    %248 = vmatprep.mubr.f32.mxu0 0.0
    %249 = vmatmul.mubr.f32.gmra.mrb[0].mxu0 %v111
    %v250 = vpop.f32.mrb[0].mxu0
    %v251 = vadd.f32 %v68, %v250
    %v252 = vpop.f32.mrb[0].mxu0
    %253 = vmatprep.mubr.f32.mxu0 0.0
    %254 = vmatmul.mubr.f32.gmra.mrb[0].mxu0 %v114
    %v255 = vpop.f32.mrb[0].mxu0
    %v256 = vadd.f32 %v68, %v255
    %v257 = vpop.f32.mrb[0].mxu0
    %258 = vmatprep.mubr.f32.mxu0 0.0
    %259 = vmatmul.mubr.f32.gmra.mrb[0].mxu0 %v117
    %v260 = vpop.f32.mrb[0].mxu0
    %v261 = vadd.f32 %v68, %v260
    %v262 = vpop.f32.mrb[0].mxu0
    %263 = vdwg.mxu0
    %vm264 = vcmp.ge.f32.partialorder %v186, 0.0
    %vm265 = vcmp.ge.f32.partialorder %v191, 0.0
    %vm266 = vcmp.ge.f32.partialorder %v196, 0.0
    %vm267 = vcmp.ge.f32.partialorder %v201, 0.0
    %vm268 = vcmp.ge.f32.partialorder %v206, 0.0
    %vm269 = vcmp.ge.f32.partialorder %v211, 0.0
    %vm270 = vcmp.ge.f32.partialorder %v216, 0.0
    %vm271 = vcmp.ge.f32.partialorder %v221, 0.0
    %vm272 = vcmp.ge.f32.partialorder %v226, 0.0
    %vm273 = vcmp.ge.f32.partialorder %v231, 0.0
    %vm274 = vcmp.ge.f32.partialorder %v236, 0.0
    %vm275 = vcmp.ge.f32.partialorder %v241, 0.0
    %vm276 = vcmp.ge.f32.partialorder %v246, 0.0
    %vm277 = vcmp.ge.f32.partialorder %v251, 0.0
    %vm278 = vcmp.ge.f32.partialorder %v256, 0.0
    %vm279 = vcmp.ge.f32.partialorder %v261, 0.0
    %v280 = vstv %s39
    %v281 = vmul.f32 %v280, %v186
    %v282 = vmul.f32 %v280, %v191
    %v283 = vmul.f32 %v280, %v196
    %v284 = vmul.f32 %v280, %v201
    %v285 = vmul.f32 %v280, %v206
    %v286 = vmul.f32 %v280, %v211
    %v287 = vmul.f32 %v280, %v216
    %v288 = vmul.f32 %v280, %v221
    %v289 = vmul.f32 %v280, %v226
    %v290 = vmul.f32 %v280, %v231
    %v291 = vmul.f32 %v280, %v236
    %v292 = vmul.f32 %v280, %v241
    %v293 = vmul.f32 %v280, %v246
    %v294 = vmul.f32 %v280, %v251
    %v295 = vmul.f32 %v280, %v256
    %v296 = vmul.f32 %v280, %v261
    %v297 = vsel %vm264, %v186, %v281
    %v298 = vsel %vm265, %v191, %v282
    %v299 = vsel %vm266, %v196, %v283
    %v300 = vsel %vm267, %v201, %v284
    %v301 = vsel %vm268, %v206, %v285
    %v302 = vsel %vm269, %v211, %v286
    %v303 = vsel %vm270, %v216, %v287
    %v304 = vsel %vm271, %v221, %v288
    %v305 = vsel %vm272, %v226, %v289
    %v306 = vsel %vm273, %v231, %v290
    %v307 = vsel %vm274, %v236, %v291
    %v308 = vsel %vm275, %v241, %v292
    %v309 = vsel %vm276, %v246, %v293
    %v310 = vsel %vm277, %v251, %v294
    %v311 = vsel %vm278, %v256, %v295
    %v312 = vsel %vm279, %v261, %v296
    %v313 = vld [vmem:[%s3] sm:$0x1]
    %v314 = vlaneseq
    %v315 = vshrl.u32 %v314, 7
    %v316 = vsub.s32 0, %v315
    %v317 = vrot.slane %v313, %v316
    %v318 = vmul.f32 %v297, %v317
    %v319 = vmul.f32 %v298, %v317
    %v320 = vmul.f32 %v299, %v317
    %v321 = vmul.f32 %v300, %v317
    %v322 = vmul.f32 %v301, %v317
    %v323 = vmul.f32 %v302, %v317
    %v324 = vmul.f32 %v303, %v317
    %v325 = vmul.f32 %v304, %v317
    %v326 = vmul.f32 %v305, %v317
    %v327 = vmul.f32 %v306, %v317
    %v328 = vmul.f32 %v307, %v317
    %v329 = vmul.f32 %v308, %v317
    %v330 = vmul.f32 %v309, %v317
    %v331 = vmul.f32 %v310, %v317
    %v332 = vmul.f32 %v311, %v317
    %v333 = vmul.f32 %v312, %v317
    %v334 = vsel %vm70, %v318, 0.0
    %335 = vadd.xlane.f32.xlu0 %v334
    %v336 = vpop.xlane.xlu0 %335
    %v337 = vsel %vm70, %v319, 0.0
    %338 = vadd.xlane.f32.xlu0 %v337
    %v339 = vpop.xlane.xlu0 %338
    %v340 = vsel %vm70, %v320, 0.0
    %341 = vadd.xlane.f32.xlu0 %v340
    %v342 = vpop.xlane.xlu0 %341
    %v343 = vsel %vm70, %v321, 0.0
    %344 = vadd.xlane.f32.xlu0 %v343
    %v345 = vpop.xlane.xlu0 %344
    %v346 = vsel %vm70, %v322, 0.0
    %347 = vadd.xlane.f32.xlu0 %v346
    %v348 = vpop.xlane.xlu0 %347
    %v349 = vsel %vm70, %v323, 0.0
    %350 = vadd.xlane.f32.xlu0 %v349
    %v351 = vpop.xlane.xlu0 %350
    %v352 = vsel %vm70, %v324, 0.0
    %353 = vadd.xlane.f32.xlu0 %v352
    %v354 = vpop.xlane.xlu0 %353
    %v355 = vsel %vm70, %v325, 0.0
    %356 = vadd.xlane.f32.xlu0 %v355
    %v357 = vpop.xlane.xlu0 %356
    %v358 = vsel %vm70, %v326, 0.0
    %359 = vadd.xlane.f32.xlu0 %v358
    %v360 = vpop.xlane.xlu0 %359
    %v361 = vsel %vm70, %v327, 0.0
    %362 = vadd.xlane.f32.xlu0 %v361
    %v363 = vpop.xlane.xlu0 %362
    %v364 = vsel %vm70, %v328, 0.0
    %365 = vadd.xlane.f32.xlu0 %v364
    %v366 = vpop.xlane.xlu0 %365
    %v367 = vsel %vm70, %v329, 0.0
    %368 = vadd.xlane.f32.xlu0 %v367
    %v369 = vpop.xlane.xlu0 %368
    %v370 = vsel %vm70, %v330, 0.0
    %371 = vadd.xlane.f32.xlu0 %v370
    %v372 = vpop.xlane.xlu0 %371
    %v373 = vsel %vm70, %v331, 0.0
    %374 = vadd.xlane.f32.xlu0 %v373
    %v375 = vpop.xlane.xlu0 %374
    %v376 = vsel %vm70, %v332, 0.0
    %377 = vadd.xlane.f32.xlu0 %v376
    %v378 = vpop.xlane.xlu0 %377
    %v379 = vsel %vm70, %v333, 0.0
    %380 = vadd.xlane.f32.xlu0 %v379
    %v381 = vpop.xlane.xlu0 %380
    %v382 = vstv %s41
    %v383 = vadd.f32 %v336, %v382
    %v384 = vadd.f32 %v339, %v382
    %v385 = vadd.f32 %v342, %v382
    %v386 = vadd.f32 %v345, %v382
    %v387 = vadd.f32 %v348, %v382
    %v388 = vadd.f32 %v351, %v382
    %v389 = vadd.f32 %v354, %v382
    %v390 = vadd.f32 %v357, %v382
    %v391 = vadd.f32 %v360, %v382
    %v392 = vadd.f32 %v363, %v382
    %v393 = vadd.f32 %v366, %v382
    %v394 = vadd.f32 %v369, %v382
    %v395 = vadd.f32 %v372, %v382
    %v396 = vadd.f32 %v375, %v382
    %v397 = vadd.f32 %v378, %v382
    %v398 = vadd.f32 %v381, %v382
    %v399 = vld [vmem:[%s3 + $0x1] sm:$0x1]
    %v400 = vlaneseq
    %v401 = vshrl.u32 %v400, 7
    %v402 = vsub.s32 0, %v401
    %v403 = vrot.slane %v399, %v402
    %v404 = vmul.f32 %v297, %v403
    %v405 = vmul.f32 %v298, %v403
    %v406 = vmul.f32 %v299, %v403
    %v407 = vmul.f32 %v300, %v403
    %v408 = vmul.f32 %v301, %v403
    %v409 = vmul.f32 %v302, %v403
    %v410 = vmul.f32 %v303, %v403
    %v411 = vmul.f32 %v304, %v403
    %v412 = vmul.f32 %v305, %v403
    %v413 = vmul.f32 %v306, %v403
    %v414 = vmul.f32 %v307, %v403
    %v415 = vmul.f32 %v308, %v403
    %v416 = vmul.f32 %v309, %v403
    %v417 = vmul.f32 %v310, %v403
    %v418 = vmul.f32 %v311, %v403
    %v419 = vmul.f32 %v312, %v403
    %v420 = vsel %vm70, %v404, 0.0
    %421 = vadd.xlane.f32.xlu0 %v420
    %v422 = vpop.xlane.xlu0 %421
    %v423 = vsel %vm70, %v405, 0.0
    %424 = vadd.xlane.f32.xlu0 %v423
    %v425 = vpop.xlane.xlu0 %424
    %v426 = vsel %vm70, %v406, 0.0
    %427 = vadd.xlane.f32.xlu0 %v426
    %v428 = vpop.xlane.xlu0 %427
    %v429 = vsel %vm70, %v407, 0.0
    %430 = vadd.xlane.f32.xlu0 %v429
    %v431 = vpop.xlane.xlu0 %430
    %v432 = vsel %vm70, %v408, 0.0
    %433 = vadd.xlane.f32.xlu0 %v432
    %v434 = vpop.xlane.xlu0 %433
    %v435 = vsel %vm70, %v409, 0.0
    %436 = vadd.xlane.f32.xlu0 %v435
    %v437 = vpop.xlane.xlu0 %436
    %v438 = vsel %vm70, %v410, 0.0
    %439 = vadd.xlane.f32.xlu0 %v438
    %v440 = vpop.xlane.xlu0 %439
    %v441 = vsel %vm70, %v411, 0.0
    %442 = vadd.xlane.f32.xlu0 %v441
    %v443 = vpop.xlane.xlu0 %442
    %v444 = vsel %vm70, %v412, 0.0
    %445 = vadd.xlane.f32.xlu0 %v444
    %v446 = vpop.xlane.xlu0 %445
    %v447 = vsel %vm70, %v413, 0.0
    %448 = vadd.xlane.f32.xlu0 %v447
    %v449 = vpop.xlane.xlu0 %448
    %v450 = vsel %vm70, %v414, 0.0
    %451 = vadd.xlane.f32.xlu0 %v450
    %v452 = vpop.xlane.xlu0 %451
    %v453 = vsel %vm70, %v415, 0.0
    %454 = vadd.xlane.f32.xlu0 %v453
    %v455 = vpop.xlane.xlu0 %454
    %v456 = vsel %vm70, %v416, 0.0
    %457 = vadd.xlane.f32.xlu0 %v456
    %v458 = vpop.xlane.xlu0 %457
    %v459 = vsel %vm70, %v417, 0.0
    %460 = vadd.xlane.f32.xlu0 %v459
    %v461 = vpop.xlane.xlu0 %460
    %v462 = vsel %vm70, %v418, 0.0
    %463 = vadd.xlane.f32.xlu0 %v462
    %v464 = vpop.xlane.xlu0 %463
    %v465 = vsel %vm70, %v419, 0.0
    %466 = vadd.xlane.f32.xlu0 %v465
    %v467 = vpop.xlane.xlu0 %466
    %v468 = vstv %s42
    %v469 = vadd.f32 %v422, %v468
    %v470 = vadd.f32 %v425, %v468
    %v471 = vadd.f32 %v428, %v468
    %v472 = vadd.f32 %v431, %v468
    %v473 = vadd.f32 %v434, %v468
    %v474 = vadd.f32 %v437, %v468
    %v475 = vadd.f32 %v440, %v468
    %v476 = vadd.f32 %v443, %v468
    %v477 = vadd.f32 %v446, %v468
    %v478 = vadd.f32 %v449, %v468
    %v479 = vadd.f32 %v452, %v468
    %v480 = vadd.f32 %v455, %v468
    %v481 = vadd.f32 %v458, %v468
    %v482 = vadd.f32 %v461, %v468
    %v483 = vadd.f32 %v464, %v468
    %v484 = vadd.f32 %v467, %v468
    %vm485 = vcmp.ge.f32.partialorder %v383, 0.0
    %vm486 = vcmp.ge.f32.partialorder %v384, 0.0
    %vm487 = vcmp.ge.f32.partialorder %v385, 0.0
    %vm488 = vcmp.ge.f32.partialorder %v386, 0.0
    %vm489 = vcmp.ge.f32.partialorder %v387, 0.0
    %vm490 = vcmp.ge.f32.partialorder %v388, 0.0
    %vm491 = vcmp.ge.f32.partialorder %v389, 0.0
    %vm492 = vcmp.ge.f32.partialorder %v390, 0.0
    %vm493 = vcmp.ge.f32.partialorder %v391, 0.0
    %vm494 = vcmp.ge.f32.partialorder %v392, 0.0
    %vm495 = vcmp.ge.f32.partialorder %v393, 0.0
    %vm496 = vcmp.ge.f32.partialorder %v394, 0.0
    %vm497 = vcmp.ge.f32.partialorder %v395, 0.0
    %vm498 = vcmp.ge.f32.partialorder %v396, 0.0
    %vm499 = vcmp.ge.f32.partialorder %v397, 0.0
    %vm500 = vcmp.ge.f32.partialorder %v398, 0.0
    %v501 = vstv %s40
    %v502 = vmul.f32 %v501, %v383
    %v503 = vmul.f32 %v501, %v384
    %v504 = vmul.f32 %v501, %v385
    %v505 = vmul.f32 %v501, %v386
    %v506 = vmul.f32 %v501, %v387
    %v507 = vmul.f32 %v501, %v388
    %v508 = vmul.f32 %v501, %v389
    %v509 = vmul.f32 %v501, %v390
    %v510 = vmul.f32 %v501, %v391
    %v511 = vmul.f32 %v501, %v392
    %v512 = vmul.f32 %v501, %v393
    %v513 = vmul.f32 %v501, %v394
    %v514 = vmul.f32 %v501, %v395
    %v515 = vmul.f32 %v501, %v396
    %v516 = vmul.f32 %v501, %v397
    %v517 = vmul.f32 %v501, %v398
    %v518 = vsel %vm485, %v383, %v502
    %v519 = vsel %vm486, %v384, %v503
    %v520 = vsel %vm487, %v385, %v504
    %v521 = vsel %vm488, %v386, %v505
    %v522 = vsel %vm489, %v387, %v506
    %v523 = vsel %vm490, %v388, %v507
    %v524 = vsel %vm491, %v389, %v508
    %v525 = vsel %vm492, %v390, %v509
    %v526 = vsel %vm493, %v391, %v510
    %v527 = vsel %vm494, %v392, %v511
    %v528 = vsel %vm495, %v393, %v512
    %v529 = vsel %vm496, %v394, %v513
    %v530 = vsel %vm497, %v395, %v514
    %v531 = vsel %vm498, %v396, %v515
    %v532 = vsel %vm499, %v397, %v516
    %v533 = vsel %vm500, %v398, %v517
    %vm534 = vcmp.ge.f32.partialorder %v469, 0.0
    %vm535 = vcmp.ge.f32.partialorder %v470, 0.0
    %vm536 = vcmp.ge.f32.partialorder %v471, 0.0
    %vm537 = vcmp.ge.f32.partialorder %v472, 0.0
    %vm538 = vcmp.ge.f32.partialorder %v473, 0.0
    %vm539 = vcmp.ge.f32.partialorder %v474, 0.0
    %vm540 = vcmp.ge.f32.partialorder %v475, 0.0
    %vm541 = vcmp.ge.f32.partialorder %v476, 0.0
    %vm542 = vcmp.ge.f32.partialorder %v477, 0.0
    %vm543 = vcmp.ge.f32.partialorder %v478, 0.0
    %vm544 = vcmp.ge.f32.partialorder %v479, 0.0
    %vm545 = vcmp.ge.f32.partialorder %v480, 0.0
    %vm546 = vcmp.ge.f32.partialorder %v481, 0.0
    %vm547 = vcmp.ge.f32.partialorder %v482, 0.0
    %vm548 = vcmp.ge.f32.partialorder %v483, 0.0
    %vm549 = vcmp.ge.f32.partialorder %v484, 0.0
    %v550 = vmul.f32 %v501, %v469
    %v551 = vmul.f32 %v501, %v470
    %v552 = vmul.f32 %v501, %v471
    %v553 = vmul.f32 %v501, %v472
    %v554 = vmul.f32 %v501, %v473
    %v555 = vmul.f32 %v501, %v474
    %v556 = vmul.f32 %v501, %v475
    %v557 = vmul.f32 %v501, %v476
    %v558 = vmul.f32 %v501, %v477
    %v559 = vmul.f32 %v501, %v478
    %v560 = vmul.f32 %v501, %v479
    %v561 = vmul.f32 %v501, %v480
    %v562 = vmul.f32 %v501, %v481
    %v563 = vmul.f32 %v501, %v482
    %v564 = vmul.f32 %v501, %v483
    %v565 = vmul.f32 %v501, %v484
    %v566 = vsel %vm534, %v469, %v550
    %v567 = vsel %vm535, %v470, %v551
    %v568 = vsel %vm536, %v471, %v552
    %v569 = vsel %vm537, %v472, %v553
    %v570 = vsel %vm538, %v473, %v554
    %v571 = vsel %vm539, %v474, %v555
    %v572 = vsel %vm540, %v475, %v556
    %v573 = vsel %vm541, %v476, %v557
    %v574 = vsel %vm542, %v477, %v558
    %v575 = vsel %vm543, %v478, %v559
    %v576 = vsel %vm544, %v479, %v560
    %v577 = vsel %vm545, %v480, %v561
    %v578 = vsel %vm546, %v481, %v562
    %v579 = vsel %vm547, %v482, %v563
    %v580 = vsel %vm548, %v483, %v564
    %v581 = vsel %vm549, %v484, %v565
    %v582 = vld [vmem:[%s4] sm:$0x1]
    %v583 = vlaneseq
    %v584 = vshrl.u32 %v583, 7
    %v585 = vsub.s32 0, %v584
    %v586 = vrot.slane %v582, %v585
    %v587 = vmul.f32 %v518, %v586
    %v588 = vmul.f32 %v519, %v586
    %v589 = vmul.f32 %v520, %v586
    %v590 = vmul.f32 %v521, %v586
    %v591 = vmul.f32 %v522, %v586
    %v592 = vmul.f32 %v523, %v586
    %v593 = vmul.f32 %v524, %v586
    %v594 = vmul.f32 %v525, %v586
    %v595 = vmul.f32 %v526, %v586
    %v596 = vmul.f32 %v527, %v586
    %v597 = vmul.f32 %v528, %v586
    %v598 = vmul.f32 %v529, %v586
    %v599 = vmul.f32 %v530, %v586
    %v600 = vmul.f32 %v531, %v586
    %v601 = vmul.f32 %v532, %v586
    %v602 = vmul.f32 %v533, %v586
    %v603 = vld [vmem:[%s4 + $0x1] sm:$0x1]
    %v604 = vlaneseq
    %v605 = vshrl.u32 %v604, 7
    %v606 = vsub.s32 0, %v605
    %v607 = vrot.slane %v603, %v606
    %v608 = vmul.f32 %v566, %v607
    %v609 = vmul.f32 %v567, %v607
    %v610 = vmul.f32 %v568, %v607
    %v611 = vmul.f32 %v569, %v607
    %v612 = vmul.f32 %v570, %v607
    %v613 = vmul.f32 %v571, %v607
    %v614 = vmul.f32 %v572, %v607
    %v615 = vmul.f32 %v573, %v607
    %v616 = vmul.f32 %v574, %v607
    %v617 = vmul.f32 %v575, %v607
    %v618 = vmul.f32 %v576, %v607
    %v619 = vmul.f32 %v577, %v607
    %v620 = vmul.f32 %v578, %v607
    %v621 = vmul.f32 %v579, %v607
    %v622 = vmul.f32 %v580, %v607
    %v623 = vmul.f32 %v581, %v607
    %v624 = vadd.f32 %v587, %v608
    %v625 = vadd.f32 %v588, %v609
    %v626 = vadd.f32 %v589, %v610
    %v627 = vadd.f32 %v590, %v611
    %v628 = vadd.f32 %v591, %v612
    %v629 = vadd.f32 %v592, %v613
    %v630 = vadd.f32 %v593, %v614
    %v631 = vadd.f32 %v594, %v615
    %v632 = vadd.f32 %v595, %v616
    %v633 = vadd.f32 %v596, %v617
    %v634 = vadd.f32 %v597, %v618
    %v635 = vadd.f32 %v598, %v619
    %v636 = vadd.f32 %v599, %v620
    %v637 = vadd.f32 %v600, %v621
    %v638 = vadd.f32 %v601, %v622
    %v639 = vadd.f32 %v602, %v623
    %v640 = vld [vmem:[%s5] sm:$0x1]
    %v642 = vlaneseq
    %v643 = vshrl.u32 %v642, 7
    %v644 = vsub.s32 0, %v643
    %v645 = vrot.slane %v640, %v644
    %v647 = vadd.f32 %v624, %v645
    %v648 = vadd.f32 %v625, %v645
    %v649 = vadd.f32 %v626, %v645
    %v650 = vadd.f32 %v627, %v645
    %v651 = vadd.f32 %v628, %v645
    %v652 = vadd.f32 %v629, %v645
    %v653 = vadd.f32 %v630, %v645
    %v654 = vadd.f32 %v631, %v645
    %v655 = vadd.f32 %v632, %v645
    %v656 = vadd.f32 %v633, %v645
    %v657 = vadd.f32 %v634, %v645
    %v658 = vadd.f32 %v635, %v645
    %v659 = vadd.f32 %v636, %v645
    %v660 = vadd.f32 %v637, %v645
    %v661 = vadd.f32 %v638, %v645
    %v662 = vadd.f32 %v639, %v645
    %vm663 = vcmask 80896
    %v664 = vsel %vm663, %v647, -inf
    %665 = vmax.xlane.f32.xlu0 %v664
    %v666 = vpop.xlane.xlu0 %665
    %v667 = vsel %vm663, %v648, -inf
    %668 = vmax.xlane.f32.xlu0 %v667
    %v669 = vpop.xlane.xlu0 %668
    %v670 = vsel %vm663, %v649, -inf
    %671 = vmax.xlane.f32.xlu0 %v670
    %v672 = vpop.xlane.xlu0 %671
    %v673 = vsel %vm663, %v650, -inf
    %674 = vmax.xlane.f32.xlu0 %v673
    %v675 = vpop.xlane.xlu0 %674
    %v676 = vsel %vm663, %v651, -inf
    %677 = vmax.xlane.f32.xlu0 %v676
    %v678 = vpop.xlane.xlu0 %677
    %v679 = vsel %vm663, %v652, -inf
    %680 = vmax.xlane.f32.xlu0 %v679
    %v681 = vpop.xlane.xlu0 %680
    %v682 = vsel %vm663, %v653, -inf
    %683 = vmax.xlane.f32.xlu0 %v682
    %v684 = vpop.xlane.xlu0 %683
    %v685 = vsel %vm663, %v654, -inf
    %686 = vmax.xlane.f32.xlu0 %v685
    %v687 = vpop.xlane.xlu0 %686
    %v688 = vsel %vm663, %v655, -inf
    %689 = vmax.xlane.f32.xlu0 %v688
    %v690 = vpop.xlane.xlu0 %689
    %v691 = vsel %vm663, %v656, -inf
    %692 = vmax.xlane.f32.xlu0 %v691
    %v693 = vpop.xlane.xlu0 %692
    %v694 = vsel %vm663, %v657, -inf
    %695 = vmax.xlane.f32.xlu0 %v694
    %v696 = vpop.xlane.xlu0 %695
    %v697 = vsel %vm663, %v658, -inf
    %698 = vmax.xlane.f32.xlu0 %v697
    %v699 = vpop.xlane.xlu0 %698
    %v700 = vsel %vm663, %v659, -inf
    %701 = vmax.xlane.f32.xlu0 %v700
    %v702 = vpop.xlane.xlu0 %701
    %v703 = vsel %vm663, %v660, -inf
    %704 = vmax.xlane.f32.xlu0 %v703
    %v705 = vpop.xlane.xlu0 %704
    %v706 = vsel %vm663, %v661, -inf
    %707 = vmax.xlane.f32.xlu0 %v706
    %v708 = vpop.xlane.xlu0 %707
    %v709 = vsel %vm663, %v662, -inf
    %710 = vmax.xlane.f32.xlu0 %v709
    %v711 = vpop.xlane.xlu0 %710
    %v712 = vsub.f32 %v647, %v666
    %v713 = vsub.f32 %v648, %v669
    %v714 = vsub.f32 %v649, %v672
    %v715 = vsub.f32 %v650, %v675
    %v716 = vsub.f32 %v651, %v678
    %v717 = vsub.f32 %v652, %v681
    %v718 = vsub.f32 %v653, %v684
    %v719 = vsub.f32 %v654, %v687
    %v720 = vsub.f32 %v655, %v690
    %v721 = vsub.f32 %v656, %v693
    %v722 = vsub.f32 %v657, %v696
    %v723 = vsub.f32 %v658, %v699
    %v724 = vsub.f32 %v659, %v702
    %v725 = vsub.f32 %v660, %v705
    %v726 = vsub.f32 %v661, %v708
    %v727 = vsub.f32 %v662, %v711
    %v728 = vmul.f32 %v712, 1.442695
    %v729 = vpow.pop %v728
    %v730 = vmul.f32 %v713, 1.442695
    %v731 = vpow.pop %v730
    %v732 = vmul.f32 %v714, 1.442695
    %v733 = vpow.pop %v732
    %v734 = vmul.f32 %v715, 1.442695
    %v735 = vpow.pop %v734
    %v736 = vmul.f32 %v716, 1.442695
    %v737 = vpow.pop %v736
    %v738 = vmul.f32 %v717, 1.442695
    %v739 = vpow.pop %v738
    %v740 = vmul.f32 %v718, 1.442695
    %v741 = vpow.pop %v740
    %v742 = vmul.f32 %v719, 1.442695
    %v743 = vpow.pop %v742
    %v744 = vmul.f32 %v720, 1.442695
    %v745 = vpow.pop %v744
    %v746 = vmul.f32 %v721, 1.442695
    %v747 = vpow.pop %v746
    %v748 = vmul.f32 %v722, 1.442695
    %v749 = vpow.pop %v748
    %v750 = vmul.f32 %v723, 1.442695
    %v751 = vpow.pop %v750
    %v752 = vmul.f32 %v724, 1.442695
    %v753 = vpow.pop %v752
    %v754 = vmul.f32 %v725, 1.442695
    %v755 = vpow.pop %v754
    %v756 = vmul.f32 %v726, 1.442695
    %v757 = vpow.pop %v756
    %v758 = vmul.f32 %v727, 1.442695
    %v759 = vpow.pop %v758
    %v760 = vsel %vm663, %v729, 0.0
    %761 = vadd.xlane.f32.xlu0 %v760
    %v762 = vpop.xlane.xlu0 %761
    %v763 = vsel %vm663, %v731, 0.0
    %764 = vadd.xlane.f32.xlu0 %v763
    %v765 = vpop.xlane.xlu0 %764
    %v766 = vsel %vm663, %v733, 0.0
    %767 = vadd.xlane.f32.xlu0 %v766
    %v768 = vpop.xlane.xlu0 %767
    %v769 = vsel %vm663, %v735, 0.0
    %770 = vadd.xlane.f32.xlu0 %v769
    %v771 = vpop.xlane.xlu0 %770
    %v772 = vsel %vm663, %v737, 0.0
    %773 = vadd.xlane.f32.xlu0 %v772
    %v774 = vpop.xlane.xlu0 %773
    %v775 = vsel %vm663, %v739, 0.0
    %776 = vadd.xlane.f32.xlu0 %v775
    %v777 = vpop.xlane.xlu0 %776
    %v778 = vsel %vm663, %v741, 0.0
    %779 = vadd.xlane.f32.xlu0 %v778
    %v780 = vpop.xlane.xlu0 %779
    %v781 = vsel %vm663, %v743, 0.0
    %782 = vadd.xlane.f32.xlu0 %v781
    %v783 = vpop.xlane.xlu0 %782
    %v784 = vsel %vm663, %v745, 0.0
    %785 = vadd.xlane.f32.xlu0 %v784
    %v786 = vpop.xlane.xlu0 %785
    %v787 = vsel %vm663, %v747, 0.0
    %788 = vadd.xlane.f32.xlu0 %v787
    %v789 = vpop.xlane.xlu0 %788
    %v790 = vsel %vm663, %v749, 0.0
    %791 = vadd.xlane.f32.xlu0 %v790
    %v792 = vpop.xlane.xlu0 %791
    %v793 = vsel %vm663, %v751, 0.0
    %794 = vadd.xlane.f32.xlu0 %v793
    %v795 = vpop.xlane.xlu0 %794
    %v796 = vsel %vm663, %v753, 0.0
    %797 = vadd.xlane.f32.xlu0 %v796
    %v798 = vpop.xlane.xlu0 %797
    %v799 = vsel %vm663, %v755, 0.0
    %800 = vadd.xlane.f32.xlu0 %v799
    %v801 = vpop.xlane.xlu0 %800
    %v802 = vsel %vm663, %v757, 0.0
    %803 = vadd.xlane.f32.xlu0 %v802
    %v804 = vpop.xlane.xlu0 %803
    %v805 = vsel %vm663, %v759, 0.0
    %806 = vadd.xlane.f32.xlu0 %v805
    %v807 = vpop.xlane.xlu0 %806
    %v808 = vlog2.pop %v762
    %v809 = vmul.f32 %v808, 0.6931472
    %v810 = vlog2.pop %v765
    %v811 = vmul.f32 %v810, 0.6931472
    %v812 = vlog2.pop %v768
    %v813 = vmul.f32 %v812, 0.6931472
    %v814 = vlog2.pop %v771
    %v815 = vmul.f32 %v814, 0.6931472
    %v816 = vlog2.pop %v774
    %v817 = vmul.f32 %v816, 0.6931472
    %v818 = vlog2.pop %v777
    %v819 = vmul.f32 %v818, 0.6931472
    %v820 = vlog2.pop %v780
    %v821 = vmul.f32 %v820, 0.6931472
    %v822 = vlog2.pop %v783
    %v823 = vmul.f32 %v822, 0.6931472
    %v824 = vlog2.pop %v786
    %v825 = vmul.f32 %v824, 0.6931472
    %v826 = vlog2.pop %v789
    %v827 = vmul.f32 %v826, 0.6931472
    %v828 = vlog2.pop %v792
    %v829 = vmul.f32 %v828, 0.6931472
    %v830 = vlog2.pop %v795
    %v831 = vmul.f32 %v830, 0.6931472
    %v832 = vlog2.pop %v798
    %v833 = vmul.f32 %v832, 0.6931472
    %v834 = vlog2.pop %v801
    %v835 = vmul.f32 %v834, 0.6931472
    %v836 = vlog2.pop %v804
    %v837 = vmul.f32 %v836, 0.6931472
    %v838 = vlog2.pop %v807
    %v839 = vmul.f32 %v838, 0.6931472
    %v840 = vsub.f32 %v712, %v809
    %v841 = vsub.f32 %v713, %v811
    %v842 = vsub.f32 %v714, %v813
    %v843 = vsub.f32 %v715, %v815
    %v844 = vsub.f32 %v716, %v817
    %v845 = vsub.f32 %v717, %v819
    %v846 = vsub.f32 %v718, %v821
    %v847 = vsub.f32 %v719, %v823
    %v848 = vsub.f32 %v720, %v825
    %v849 = vsub.f32 %v721, %v827
    %v850 = vsub.f32 %v722, %v829
    %v851 = vsub.f32 %v723, %v831
    %v852 = vsub.f32 %v724, %v833
    %v853 = vsub.f32 %v725, %v835
    %v854 = vsub.f32 %v726, %v837
    %v855 = vsub.f32 %v727, %v839
    %856 = vst.msk [vmem:[%s7] sm:$0xff] %vm663, %v840
    %857 = vst.msk [vmem:[%s7 + $0x8] sm:$0xff] %vm663, %v841
    %858 = vst.msk [vmem:[%s7 + $0x10] sm:$0xff] %vm663, %v842
    %859 = vst.msk [vmem:[%s7 + $0x18] sm:$0xff] %vm663, %v843
    %860 = vst.msk [vmem:[%s7 + $0x20] sm:$0xff] %vm663, %v844
    %861 = vst.msk [vmem:[%s7 + $0x28] sm:$0xff] %vm663, %v845
    %862 = vst.msk [vmem:[%s7 + $0x30] sm:$0xff] %vm663, %v846
    %863 = vst.msk [vmem:[%s7 + $0x38] sm:$0xff] %vm663, %v847
    %864 = vst.msk [vmem:[%s7 + $0x40] sm:$0xff] %vm663, %v848
    %865 = vst.msk [vmem:[%s7 + $0x48] sm:$0xff] %vm663, %v849
    %866 = vst.msk [vmem:[%s7 + $0x50] sm:$0xff] %vm663, %v850
    %867 = vst.msk [vmem:[%s7 + $0x58] sm:$0xff] %vm663, %v851
    %868 = vst.msk [vmem:[%s7 + $0x60] sm:$0xff] %vm663, %v852
    %869 = vst.msk [vmem:[%s7 + $0x68] sm:$0xff] %vm663, %v853
    %870 = vst.msk [vmem:[%s7 + $0x70] sm:$0xff] %vm663, %v854
    %871 = vst.msk [vmem:[%s7 + $0x78] sm:$0xff] %vm663, %v855
    // Predicated region
    $region34: #{classification_net_forward.1} parent=1 // pred_check
      _
    $region35: #{classification_net_forward.1} parent=1 // pred_check_branch
      %873 = sbr.rel (0) target = $region37
    $region36: #{classification_net_forward.1} parent=1 // pred_region
      _
    $region37: #{classification_net_forward.1} parent=1 // pred_fallthru
      _
    // Predicated region
    $region38: #{classification_net_forward.1} parent=1 // pred_check
      _
    $region39: #{classification_net_forward.1} parent=1 // pred_check_branch
      %875 = sbr.rel (0) target = $region41
    $region40: #{classification_net_forward.1} parent=1 // pred_region
      _
    $region41: #{classification_net_forward.1} parent=1 // pred_fallthru
      _
    %876 = vsyncpa [#allocation3], 1

</llo_original>
